<compile_context>
chip_gen: v6e
topology: v6e:2x2x1
jax: 0.10.0
libtpu: 0.0.40
codegen_flags: <defaults>
</compile_context>

<pallas_src>
import jax
import jax.numpy as jnp
from jax.experimental import pallas as pl
from jax.experimental.pallas import tpu as pltpu

LEAKY_SLOPE = 0.01   # default negative_slope of nn.LeakyReLU / F.leaky_relu
BN_EPS = 1e-5
_SUBLANE = 8         # f32 sublane tile


# ----------------------------- static config helpers ------------------------

def _dims(foc, num_classes):
    C0 = foc * 2                       # classifier inchannel
    C1 = foc * 4                       # layer1 channels
    C2 = foc * 2                       # layer2 channels
    ncls = 1 if num_classes == 2 else num_classes
    return C0, C1, C2, ncls


def _layout(C0, C1, C2, ncls):
    """Row layout of the single packed parameter block.

    'wf*' = fused [conv3a + 1x1-shortcut] weights (BN folded, bias row appended),
    'w*b' = second conv3 weights (BN folded, bias row appended),
    'wct' = final 1x1 conv, stored transposed (ncls, C2)."""
    entries = [
        ('wf1', 3 * C0 + 1, 2 * C1),
        ('w1b', 3 * C1 + 1, C1),
        ('wf2', 3 * C1 + 1, 2 * C2),
        ('w2b', 3 * C2 + 1, C2),
        ('wct', ncls, C2),
    ]
    layout, off = {}, 0
    for name, r, c in entries:
        layout[name] = (off, r, c)
        off += r
    rows = off + (-off) % _SUBLANE
    cols = max(c for _, _, c in entries)
    return layout, rows, cols


# ----------------------------------- the fused Pallas kernel ----------------

def _make_kernel(B, L, C0, C1, C2, ncls, layout):
    assert L % 9 == 0, "length must survive two MaxPool1d(3) stages cleanly"
    L1, L2 = L, L // 3
    del C0  # shapes come from the layout / ref shapes

    def lrelu(v):
        return jnp.where(v > 0, v, LEAKY_SLOPE * v)

    def xcat_ones(x, seq_len):
        """im2col rows [x[r-1] | x[r] | x[r+1] | 1] with the conv's zero padding
        restored at every per-batch sequence edge (rows = (batch, length) flat)."""
        n, cin = x.shape
        zrow = jnp.zeros((1, cin), jnp.float32)
        prev = jnp.concatenate([zrow, x[:-1, :]], axis=0)    # x[r-1]
        nxt = jnp.concatenate([x[1:, :], zrow], axis=0)      # x[r+1]
        if B > 1:
            # zero rows that leaked across interior batch boundaries
            rows = jax.lax.broadcasted_iota(jnp.int32, (n, cin), 0)
            is_start = rows == seq_len
            is_end = rows == seq_len - 1
            for b in range(2, B):
                is_start = jnp.logical_or(is_start, rows == b * seq_len)
                is_end = jnp.logical_or(is_end, rows == b * seq_len - 1)
            prev = jnp.where(is_start, 0.0, prev)
            nxt = jnp.where(is_end, 0.0, nxt)
        ones = jnp.ones((n, 1), jnp.float32)                 # bias column
        return jnp.concatenate([prev, x, nxt, ones], axis=1)  # (n, 3*cin+1)

    def maxpool3(v):
        """nn.MaxPool1d(3): sliding max + 0/1 selection matmul for the stride-3
        downsample (no per-window slices/concats, no sublane-splitting reshape)."""
        n, _ = v.shape
        n_out, n_mid = n // 3, n - 2
        m = jnp.maximum(v[:-2, :], jnp.maximum(v[1:-1, :], v[2:, :]))
        jj = jax.lax.broadcasted_iota(jnp.int32, (n_out, n_mid), 0)
        rr = jax.lax.broadcasted_iota(jnp.int32, (n_out, n_mid), 1)
        sel = (rr == 3 * jj).astype(jnp.float32)
        return jnp.dot(sel, m, preferred_element_type=jnp.float32)

    def resblock(x, seq_len, w_fused, w_b, c_out):
        # One matmul produces BOTH the first conv3+BN (+bias via ones col) and the
        # 1x1-shortcut+BN: columns [0:c_out] = left branch, [c_out:2c_out] = shortcut.
        y = jnp.dot(xcat_ones(x, seq_len), w_fused,
                    preferred_element_type=jnp.float32)
        left = lrelu(y[:, 0:c_out])
        short = y[:, c_out:2 * c_out]
        # TODO(synk): nn.Dropout layers are identity here (eval-mode semantics).
        left = jnp.dot(xcat_ones(left, seq_len), w_b,
                       preferred_element_type=jnp.float32)
        return maxpool3(lrelu(left + short))

    def kernel(x_ref, p_ref, out_ref):
        def pget(name):                      # static slices of the packed params
            off, r, c = layout[name]
            return p_ref[off:off + r, 0:c]

        x = x_ref[...]                       # (B*L, C0) f32
        h = resblock(x, L1, pget('wf1'), pget('w1b'), C1)
        h = resblock(h, L2, pget('wf2'), pget('w2b'), C2)
        # Final 1x1 conv (no bias) + sigmoid, computed lane-dense:
        # (ncls, C2) @ (C2, B*L3) keeps length on lanes for the output store.
        logits = jnp.dot(pget('wct'), h.T, preferred_element_type=jnp.float32)
        out_ref[...] = jax.nn.sigmoid(logits)        # (ncls, B*L3)

    return kernel


# ----------------------------------- wrapper / params -----------------------

def classifier_forward(x_ncl, params, *, foc=2, num_classes=2):
    """x_ncl: (B, C0, L) PyTorch NCL layout; returns (B, num_out_channels, L//9)."""
    C0, C1, C2, ncls = _dims(foc, num_classes)
    B, c_in, L = x_ncl.shape
    assert c_in == C0 and L % 9 == 0
    L3 = L // 9
    layout, rows, cols = _layout(C0, C1, C2, ncls)
    assert params['packed'].shape == (rows, cols)

    # NCL -> flat (B*L, C0) rows. One cheap XLA transform on a tiny array; doing it
    # in-kernel would require a sublane-merging relayout anyway.
    x2 = jnp.transpose(x_ncl, (0, 2, 1)).reshape(B * L, C0).astype(jnp.float32)

    kernel = _make_kernel(B, L, C0, C1, C2, ncls, layout)
    vmem = pl.BlockSpec(memory_space=pltpu.MemorySpace.VMEM)
    # TODO(synk): at realistic B/L, add grid=(B,) (or B*L tiles) with
    # dimension_semantics=("parallel",) to shard across v7x's 2 TensorCores and
    # bf16-cast the matmul operands on v6e/v7x; at this toy size a grid only adds
    # per-step overhead.
    out = pl.pallas_call(
        kernel,
        out_shape=jax.ShapeDtypeStruct((ncls, B * L3), jnp.float32),
        in_specs=[vmem, vmem],
        out_specs=vmem,
    )(x2, params['packed'])
    # (ncls, B*L3) -> (B, ncls, L3): pure metadata ops outside the kernel.
    return jnp.swapaxes(out.reshape(ncls, B, L3), 0, 1)


def fold_bn(gamma, beta, mean, var):
    scale = gamma / jnp.sqrt(var + BN_EPS)
    bias = beta - mean * scale
    return scale, bias


def init_params(key, foc=2, num_classes=2):
    C0, C1, C2, ncls = _dims(foc, num_classes)
    layout, rows, cols = _layout(C0, C1, C2, ncls)
    keys = iter(jax.random.split(key, 16))

    def conv_w(k, ksize, cin, cout):
        # stored as (kernel, Cin, Cout): w[k, ci, co] == torch conv weight[co, ci, k]
        return 0.1 * jax.random.normal(k, (ksize, cin, cout), jnp.float32)

    def bn(k, c):
        k1, k2, k3, k4 = jax.random.split(k, 4)
        gamma = 1.0 + 0.1 * jax.random.normal(k1, (c,), jnp.float32)
        beta = 0.1 * jax.random.normal(k2, (c,), jnp.float32)
        mean = 0.1 * jax.random.normal(k3, (c,), jnp.float32)   # running_mean
        var = 0.5 + jax.random.uniform(k4, (c,), jnp.float32)   # running_var
        return fold_bn(gamma, beta, mean, var)

    w1a = conv_w(next(keys), 3, C0, C1); s1a, b1a = bn(next(keys), C1)
    w1b = conv_w(next(keys), 3, C1, C1); s1b, b1b = bn(next(keys), C1)
    wsc1 = conv_w(next(keys), 1, C0, C1)[0]; ssc1, bsc1 = bn(next(keys), C1)
    w2a = conv_w(next(keys), 3, C1, C2); s2a, b2a = bn(next(keys), C2)
    w2b = conv_w(next(keys), 3, C2, C2); s2b, b2b = bn(next(keys), C2)
    wsc2 = conv_w(next(keys), 1, C1, C2)[0]; ssc2, bsc2 = bn(next(keys), C2)
    wc = conv_w(next(keys), 1, C2, ncls)[0]

    # One-time offline transforms:
    #   * fold BN scale into conv weights, BN bias into the ones-column row,
    #   * reshape 3-tap convs to im2col rows matching [x[r-1] | x[r] | x[r+1] | 1],
    #   * place the 1x1 shortcut weight in the middle (x[r]) section of the fused
    #     matrix so conv3a + shortcut come out of a single matmul,
    #   * transpose the final 1x1 conv to (ncls, C2), pack everything in one block.
    def fuse_first(cin, cout, wa, sa, ba, wsc, ssc, bsc):
        t = jnp.zeros((3 * cin + 1, 2 * cout), jnp.float32)
        t = t.at[:3 * cin, :cout].set((wa * sa).reshape(3 * cin, cout))
        t = t.at[3 * cin, :cout].set(ba)                     # left-branch BN bias
        t = t.at[cin:2 * cin, cout:].set(wsc * ssc)          # shortcut on x[r] rows
        t = t.at[3 * cin, cout:].set(bsc)                    # shortcut BN bias
        return t

    def fuse_second(cin, cout, wb, sb, bb):
        t = jnp.zeros((3 * cin + 1, cout), jnp.float32)
        t = t.at[:3 * cin, :].set((wb * sb).reshape(3 * cin, cout))
        t = t.at[3 * cin, :].set(bb)
        return t

    tensors = {
        'wf1': fuse_first(C0, C1, w1a, s1a, b1a, wsc1, ssc1, bsc1),
        'w1b': fuse_second(C1, C1, w1b, s1b, b1b),
        'wf2': fuse_first(C1, C2, w2a, s2a, b2a, wsc2, ssc2, bsc2),
        'w2b': fuse_second(C2, C2, w2b, s2b, b2b),
        'wct': wc.T,
    }
    packed = jnp.zeros((rows, cols), jnp.float32)
    for name, t in tensors.items():
        off, r, c = layout[name]
        packed = packed.at[off:off + r, 0:c].set(t.reshape(r, c))
    return {'packed': packed}


if __name__ == "__main__":
    key = jax.random.PRNGKey(0)
    k_x, k_p = jax.random.split(key)

    B, foc, L = 2, 2, 18
    C0 = foc * 2
    x = jax.random.normal(k_x, (B, C0, L), jnp.float32)   # PyTorch NCL input
    params = init_params(k_p, foc=foc, num_classes=2)

    out = classifier_forward(x, params, foc=foc, num_classes=2)
    out = jax.block_until_ready(out)
    assert out.shape == (B, 1, L // 9), out.shape
    assert bool(jnp.all((out > 0.0) & (out < 1.0)))       # sigmoid range sanity
    print("KERNEL_OK")
</pallas_src>

<mosaic_0001>
module attributes {stable_mosaic.version = 11 : i64} {
  func.func @kernel(%arg0: memref<36x4xf32, #tpu.memory_space<vmem>>, %arg1: memref<80x16xf32, #tpu.memory_space<vmem>>, %arg2: memref<1x4xf32, #tpu.memory_space<vmem>>) attributes {dimension_semantics = [], scalar_prefetch = 0 : i64, scratch_operands = 0 : i64, tpu.core_type = #tpu.core_type<tc>} {
    %c0 = arith.constant 0 : index
    %c0_0 = arith.constant 0 : index
    %0 = vector.load %arg0[%c0, %c0_0] : memref<36x4xf32, #tpu.memory_space<vmem>>, vector<36x4xf32>
    %c0_1 = arith.constant 0 : index
    %c0_2 = arith.constant 0 : index
    %1 = vector.load %arg1[%c0_1, %c0_2] : memref<80x16xf32, #tpu.memory_space<vmem>>, vector<13x16xf32>
    %c13 = arith.constant 13 : index
    %c0_3 = arith.constant 0 : index
    %2 = vector.load %arg1[%c13, %c0_3] : memref<80x16xf32, #tpu.memory_space<vmem>>, vector<25x8xf32>
    %cst = arith.constant 0.000000e+00 : f32
    %3 = vector.broadcast %cst : f32 to vector<1x4xf32>
    %4 = vector.extract_strided_slice %0 {offsets = [0, 0], sizes = [35, 4], strides = [1, 1]} : vector<36x4xf32> to vector<35x4xf32>
    %5 = tpu.concatenate %3, %4 in 0 : vector<1x4xf32>, vector<35x4xf32> -> vector<36x4xf32>
    %6 = vector.extract_strided_slice %0 {offsets = [1, 0], sizes = [35, 4], strides = [1, 1]} : vector<36x4xf32> to vector<35x4xf32>
    %7 = tpu.concatenate %6, %3 in 0 : vector<35x4xf32>, vector<1x4xf32> -> vector<36x4xf32>
    %8 = tpu.iota {dimensions = array<i32: 0>} : vector<36x4xi32>
    %c18_i32 = arith.constant 18 : i32
    %9 = vector.broadcast %c18_i32 : i32 to vector<36x4xi32>
    %10 = arith.cmpi eq, %8, %9 : vector<36x4xi32>
    %c17_i32 = arith.constant 17 : i32
    %11 = vector.broadcast %c17_i32 : i32 to vector<36x4xi32>
    %12 = arith.cmpi eq, %8, %11 : vector<36x4xi32>
    %cst_4 = arith.constant 0.000000e+00 : f32
    %13 = vector.broadcast %cst_4 : f32 to vector<36x4xf32>
    %14 = arith.select %10, %13, %5 : vector<36x4xi1>, vector<36x4xf32>
    %cst_5 = arith.constant 0.000000e+00 : f32
    %15 = vector.broadcast %cst_5 : f32 to vector<36x4xf32>
    %16 = arith.select %12, %15, %7 : vector<36x4xi1>, vector<36x4xf32>
    %cst_6 = arith.constant 1.000000e+00 : f32
    %17 = vector.broadcast %cst_6 : f32 to vector<36x1xf32>
    %18 = tpu.concatenate %14, %0, %16, %17 in 1 : vector<36x4xf32>, vector<36x4xf32>, vector<36x4xf32>, vector<36x1xf32> -> vector<36x13xf32>
    %cst_7 = arith.constant dense<0.000000e+00> : vector<36x16xf32>
    %19 = tpu.matmul %18, %1, %cst_7 {dimension_numbers = #tpu.dot_dimension_numbers<[1], [0], [0], [1], [0, 0, 1, 1], [], []>} : vector<36x13xf32>, vector<13x16xf32>, vector<36x16xf32> -> vector<36x16xf32>
    %20 = vector.extract_strided_slice %19 {offsets = [0, 0], sizes = [36, 8], strides = [1, 1]} : vector<36x16xf32> to vector<36x8xf32>
    %cst_8 = arith.constant 0.000000e+00 : f32
    %21 = vector.broadcast %cst_8 : f32 to vector<36x8xf32>
    %22 = arith.cmpf ogt, %20, %21 : vector<36x8xf32>
    %cst_9 = arith.constant 0.00999999977 : f32
    %23 = vector.broadcast %cst_9 : f32 to vector<36x8xf32>
    %24 = arith.mulf %23, %20 : vector<36x8xf32>
    %25 = arith.select %22, %20, %24 : vector<36x8xi1>, vector<36x8xf32>
    %26 = vector.extract_strided_slice %19 {offsets = [0, 8], sizes = [36, 8], strides = [1, 1]} : vector<36x16xf32> to vector<36x8xf32>
    %cst_10 = arith.constant 0.000000e+00 : f32
    %27 = vector.broadcast %cst_10 : f32 to vector<1x8xf32>
    %28 = vector.extract_strided_slice %25 {offsets = [0, 0], sizes = [35, 8], strides = [1, 1]} : vector<36x8xf32> to vector<35x8xf32>
    %29 = tpu.concatenate %27, %28 in 0 : vector<1x8xf32>, vector<35x8xf32> -> vector<36x8xf32>
    %30 = vector.extract_strided_slice %25 {offsets = [1, 0], sizes = [35, 8], strides = [1, 1]} : vector<36x8xf32> to vector<35x8xf32>
    %31 = tpu.concatenate %30, %27 in 0 : vector<35x8xf32>, vector<1x8xf32> -> vector<36x8xf32>
    %32 = tpu.iota {dimensions = array<i32: 0>} : vector<36x8xi32>
    %c18_i32_11 = arith.constant 18 : i32
    %33 = vector.broadcast %c18_i32_11 : i32 to vector<36x8xi32>
    %34 = arith.cmpi eq, %32, %33 : vector<36x8xi32>
    %c17_i32_12 = arith.constant 17 : i32
    %35 = vector.broadcast %c17_i32_12 : i32 to vector<36x8xi32>
    %36 = arith.cmpi eq, %32, %35 : vector<36x8xi32>
    %cst_13 = arith.constant 0.000000e+00 : f32
    %37 = vector.broadcast %cst_13 : f32 to vector<36x8xf32>
    %38 = arith.select %34, %37, %29 : vector<36x8xi1>, vector<36x8xf32>
    %cst_14 = arith.constant 0.000000e+00 : f32
    %39 = vector.broadcast %cst_14 : f32 to vector<36x8xf32>
    %40 = arith.select %36, %39, %31 : vector<36x8xi1>, vector<36x8xf32>
    %cst_15 = arith.constant 1.000000e+00 : f32
    %41 = vector.broadcast %cst_15 : f32 to vector<36x1xf32>
    %42 = tpu.concatenate %38, %25, %40, %41 in 1 : vector<36x8xf32>, vector<36x8xf32>, vector<36x8xf32>, vector<36x1xf32> -> vector<36x25xf32>
    %cst_16 = arith.constant dense<0.000000e+00> : vector<36x8xf32>
    %43 = tpu.matmul %42, %2, %cst_16 {dimension_numbers = #tpu.dot_dimension_numbers<[1], [0], [0], [1], [0, 0, 1, 1], [], []>} : vector<36x25xf32>, vector<25x8xf32>, vector<36x8xf32> -> vector<36x8xf32>
    %44 = arith.addf %43, %26 : vector<36x8xf32>
    %cst_17 = arith.constant 0.000000e+00 : f32
    %45 = vector.broadcast %cst_17 : f32 to vector<36x8xf32>
    %46 = arith.cmpf ogt, %44, %45 : vector<36x8xf32>
    %cst_18 = arith.constant 0.00999999977 : f32
    %47 = vector.broadcast %cst_18 : f32 to vector<36x8xf32>
    %48 = arith.mulf %47, %44 : vector<36x8xf32>
    %49 = arith.select %46, %44, %48 : vector<36x8xi1>, vector<36x8xf32>
    %50 = vector.extract_strided_slice %49 {offsets = [0, 0], sizes = [34, 8], strides = [1, 1]} : vector<36x8xf32> to vector<34x8xf32>
    %51 = vector.extract_strided_slice %49 {offsets = [1, 0], sizes = [34, 8], strides = [1, 1]} : vector<36x8xf32> to vector<34x8xf32>
    %52 = vector.extract_strided_slice %49 {offsets = [2, 0], sizes = [34, 8], strides = [1, 1]} : vector<36x8xf32> to vector<34x8xf32>
    %53 = arith.maximumf %51, %52 : vector<34x8xf32>
    %54 = arith.maximumf %50, %53 : vector<34x8xf32>
    %55 = tpu.iota {dimensions = array<i32: 0>} : vector<12x34xi32>
    %56 = tpu.iota {dimensions = array<i32: 1>} : vector<12x34xi32>
    %c3_i32 = arith.constant 3 : i32
    %57 = vector.broadcast %c3_i32 : i32 to vector<12x34xi32>
    %58 = arith.muli %57, %55 : vector<12x34xi32>
    %59 = arith.cmpi eq, %56, %58 : vector<12x34xi32>
    %60 = arith.extui %59 : vector<12x34xi1> to vector<12x34xi32>
    %61 = arith.sitofp %60 : vector<12x34xi32> to vector<12x34xf32>
    %cst_19 = arith.constant dense<0.000000e+00> : vector<12x8xf32>
    %62 = tpu.matmul %61, %54, %cst_19 {dimension_numbers = #tpu.dot_dimension_numbers<[1], [0], [0], [1], [0, 0, 1, 1], [], []>} : vector<12x34xf32>, vector<34x8xf32>, vector<12x8xf32> -> vector<12x8xf32>
    %c38 = arith.constant 38 : index
    %c0_20 = arith.constant 0 : index
    %63 = vector.load %arg1[%c38, %c0_20] : memref<80x16xf32, #tpu.memory_space<vmem>>, vector<25x8xf32>
    %c63 = arith.constant 63 : index
    %c0_21 = arith.constant 0 : index
    %64 = vector.load %arg1[%c63, %c0_21] : memref<80x16xf32, #tpu.memory_space<vmem>>, vector<13x4xf32>
    %cst_22 = arith.constant 0.000000e+00 : f32
    %65 = vector.broadcast %cst_22 : f32 to vector<1x8xf32>
    %66 = vector.extract_strided_slice %62 {offsets = [0, 0], sizes = [11, 8], strides = [1, 1]} : vector<12x8xf32> to vector<11x8xf32>
    %67 = tpu.concatenate %65, %66 in 0 : vector<1x8xf32>, vector<11x8xf32> -> vector<12x8xf32>
    %68 = vector.extract_strided_slice %62 {offsets = [1, 0], sizes = [11, 8], strides = [1, 1]} : vector<12x8xf32> to vector<11x8xf32>
    %69 = tpu.concatenate %68, %65 in 0 : vector<11x8xf32>, vector<1x8xf32> -> vector<12x8xf32>
    %70 = tpu.iota {dimensions = array<i32: 0>} : vector<12x8xi32>
    %c6_i32 = arith.constant 6 : i32
    %71 = vector.broadcast %c6_i32 : i32 to vector<12x8xi32>
    %72 = arith.cmpi eq, %70, %71 : vector<12x8xi32>
    %c5_i32 = arith.constant 5 : i32
    %73 = vector.broadcast %c5_i32 : i32 to vector<12x8xi32>
    %74 = arith.cmpi eq, %70, %73 : vector<12x8xi32>
    %cst_23 = arith.constant 0.000000e+00 : f32
    %75 = vector.broadcast %cst_23 : f32 to vector<12x8xf32>
    %76 = arith.select %72, %75, %67 : vector<12x8xi1>, vector<12x8xf32>
    %cst_24 = arith.constant 0.000000e+00 : f32
    %77 = vector.broadcast %cst_24 : f32 to vector<12x8xf32>
    %78 = arith.select %74, %77, %69 : vector<12x8xi1>, vector<12x8xf32>
    %cst_25 = arith.constant 1.000000e+00 : f32
    %79 = vector.broadcast %cst_25 : f32 to vector<12x1xf32>
    %80 = tpu.concatenate %76, %62, %78, %79 in 1 : vector<12x8xf32>, vector<12x8xf32>, vector<12x8xf32>, vector<12x1xf32> -> vector<12x25xf32>
    %cst_26 = arith.constant dense<0.000000e+00> : vector<12x8xf32>
    %81 = tpu.matmul %80, %63, %cst_26 {dimension_numbers = #tpu.dot_dimension_numbers<[1], [0], [0], [1], [0, 0, 1, 1], [], []>} : vector<12x25xf32>, vector<25x8xf32>, vector<12x8xf32> -> vector<12x8xf32>
    %82 = vector.extract_strided_slice %81 {offsets = [0, 0], sizes = [12, 4], strides = [1, 1]} : vector<12x8xf32> to vector<12x4xf32>
    %cst_27 = arith.constant 0.000000e+00 : f32
    %83 = vector.broadcast %cst_27 : f32 to vector<12x4xf32>
    %84 = arith.cmpf ogt, %82, %83 : vector<12x4xf32>
    %cst_28 = arith.constant 0.00999999977 : f32
    %85 = vector.broadcast %cst_28 : f32 to vector<12x4xf32>
    %86 = arith.mulf %85, %82 : vector<12x4xf32>
    %87 = arith.select %84, %82, %86 : vector<12x4xi1>, vector<12x4xf32>
    %88 = vector.extract_strided_slice %81 {offsets = [0, 4], sizes = [12, 4], strides = [1, 1]} : vector<12x8xf32> to vector<12x4xf32>
    %cst_29 = arith.constant 0.000000e+00 : f32
    %89 = vector.broadcast %cst_29 : f32 to vector<1x4xf32>
    %90 = vector.extract_strided_slice %87 {offsets = [0, 0], sizes = [11, 4], strides = [1, 1]} : vector<12x4xf32> to vector<11x4xf32>
    %91 = tpu.concatenate %89, %90 in 0 : vector<1x4xf32>, vector<11x4xf32> -> vector<12x4xf32>
    %92 = vector.extract_strided_slice %87 {offsets = [1, 0], sizes = [11, 4], strides = [1, 1]} : vector<12x4xf32> to vector<11x4xf32>
    %93 = tpu.concatenate %92, %89 in 0 : vector<11x4xf32>, vector<1x4xf32> -> vector<12x4xf32>
    %94 = tpu.iota {dimensions = array<i32: 0>} : vector<12x4xi32>
    %c6_i32_30 = arith.constant 6 : i32
    %95 = vector.broadcast %c6_i32_30 : i32 to vector<12x4xi32>
    %96 = arith.cmpi eq, %94, %95 : vector<12x4xi32>
    %c5_i32_31 = arith.constant 5 : i32
    %97 = vector.broadcast %c5_i32_31 : i32 to vector<12x4xi32>
    %98 = arith.cmpi eq, %94, %97 : vector<12x4xi32>
    %cst_32 = arith.constant 0.000000e+00 : f32
    %99 = vector.broadcast %cst_32 : f32 to vector<12x4xf32>
    %100 = arith.select %96, %99, %91 : vector<12x4xi1>, vector<12x4xf32>
    %cst_33 = arith.constant 0.000000e+00 : f32
    %101 = vector.broadcast %cst_33 : f32 to vector<12x4xf32>
    %102 = arith.select %98, %101, %93 : vector<12x4xi1>, vector<12x4xf32>
    %cst_34 = arith.constant 1.000000e+00 : f32
    %103 = vector.broadcast %cst_34 : f32 to vector<12x1xf32>
    %104 = tpu.concatenate %100, %87, %102, %103 in 1 : vector<12x4xf32>, vector<12x4xf32>, vector<12x4xf32>, vector<12x1xf32> -> vector<12x13xf32>
    %cst_35 = arith.constant dense<0.000000e+00> : vector<12x4xf32>
    %105 = tpu.matmul %104, %64, %cst_35 {dimension_numbers = #tpu.dot_dimension_numbers<[1], [0], [0], [1], [0, 0, 1, 1], [], []>} : vector<12x13xf32>, vector<13x4xf32>, vector<12x4xf32> -> vector<12x4xf32>
    %106 = arith.addf %105, %88 : vector<12x4xf32>
    %cst_36 = arith.constant 0.000000e+00 : f32
    %107 = vector.broadcast %cst_36 : f32 to vector<12x4xf32>
    %108 = arith.cmpf ogt, %106, %107 : vector<12x4xf32>
    %cst_37 = arith.constant 0.00999999977 : f32
    %109 = vector.broadcast %cst_37 : f32 to vector<12x4xf32>
    %110 = arith.mulf %109, %106 : vector<12x4xf32>
    %111 = arith.select %108, %106, %110 : vector<12x4xi1>, vector<12x4xf32>
    %112 = vector.extract_strided_slice %111 {offsets = [0, 0], sizes = [10, 4], strides = [1, 1]} : vector<12x4xf32> to vector<10x4xf32>
    %113 = vector.extract_strided_slice %111 {offsets = [1, 0], sizes = [10, 4], strides = [1, 1]} : vector<12x4xf32> to vector<10x4xf32>
    %114 = vector.extract_strided_slice %111 {offsets = [2, 0], sizes = [10, 4], strides = [1, 1]} : vector<12x4xf32> to vector<10x4xf32>
    %115 = arith.maximumf %113, %114 : vector<10x4xf32>
    %116 = arith.maximumf %112, %115 : vector<10x4xf32>
    %117 = tpu.iota {dimensions = array<i32: 0>} : vector<4x10xi32>
    %118 = tpu.iota {dimensions = array<i32: 1>} : vector<4x10xi32>
    %c3_i32_38 = arith.constant 3 : i32
    %119 = vector.broadcast %c3_i32_38 : i32 to vector<4x10xi32>
    %120 = arith.muli %119, %117 : vector<4x10xi32>
    %121 = arith.cmpi eq, %118, %120 : vector<4x10xi32>
    %122 = arith.extui %121 : vector<4x10xi1> to vector<4x10xi32>
    %123 = arith.sitofp %122 : vector<4x10xi32> to vector<4x10xf32>
    %cst_39 = arith.constant dense<0.000000e+00> : vector<4x4xf32>
    %124 = tpu.matmul %123, %116, %cst_39 {dimension_numbers = #tpu.dot_dimension_numbers<[1], [0], [0], [1], [0, 0, 1, 1], [], []>} : vector<4x10xf32>, vector<10x4xf32>, vector<4x4xf32> -> vector<4x4xf32>
    %c76 = arith.constant 76 : index
    %c0_40 = arith.constant 0 : index
    %125 = vector.load %arg1[%c76, %c0_40] : memref<80x16xf32, #tpu.memory_space<vmem>>, vector<1x4xf32>
    %126 = tpu.transpose %124, [1, 0] : vector<4x4xf32> -> vector<4x4xf32>
    %cst_41 = arith.constant dense<0.000000e+00> : vector<1x4xf32>
    %127 = tpu.matmul %125, %126, %cst_41 {dimension_numbers = #tpu.dot_dimension_numbers<[1], [0], [0], [1], [0, 0, 1, 1], [], []>} : vector<1x4xf32>, vector<4x4xf32>, vector<1x4xf32> -> vector<1x4xf32>
    %128 = arith.negf %127 : vector<1x4xf32>
    %129 = math.exp %128 : vector<1x4xf32>
    %cst_42 = arith.constant 1.000000e+00 : f32
    %130 = vector.broadcast %cst_42 : f32 to vector<1x4xf32>
    %131 = arith.addf %130, %129 : vector<1x4xf32>
    %132 = arith.divf %130, %131 : vector<1x4xf32>
    %c0_43 = arith.constant 0 : index
    %c0_44 = arith.constant 0 : index
    %133 = vector.load %arg2[%c0_43, %c0_44] : memref<1x4xf32, #tpu.memory_space<vmem>>, vector<1x4xf32>
    tpu.vector_store %arg2[%c0_43, %c0_44], %132 {strides = array<i32>} : memref<1x4xf32, #tpu.memory_space<vmem>>, vector<1x4xf32>,
    return
  }
}

</mosaic_0001>

<llo_original>
// kernel: tpu_custom_call.1
$region0: #{tpu_custom_call.1}
  #allocation0 [shape = 'u32[]', space=smem, size = 0x4, offset = 0x4, fixed_abs, tag = 'smem constant byte address 0x4 - core index']
  #allocation1 [shape = 'u32[144,128]{1,0:T(1,128)}', space=vmem, size = 0x12000, scoped, tag = 'internal scratch']
  %s0 = inlined_call_operand.vmem [shape: f32[36,4], index: 0, kind: input, shape index: {}]
  %s1 = inlined_call_operand.vmem [shape: f32[80,16], index: 1, kind: input, shape index: {}]
  %s2 = inlined_call_operand.hbm [shape: f32[1,4], index: 2, kind: output, shape index: {}]
  %s3 = sld [smem:[#allocation0]]
  $region18: #{tpu_custom_call.1} parent=0
    _
  %s5 = ssub.s32 1, %s3
  %s6 = scalar_select 0, %s5, %s3
  $region1: #{tpu_custom_call.1} parent=0
    #allocation2 [shape = 'u8[512]{0}', space=vmem, size = 0x400, scoped, tag = 'output window, operand 0, single buffered']
    #allocation3 [shape = 's32[1]{0}', space=sflag, size = 0x4, scoped, tag = 'scoped memory for tpu_custom_call.1']
    %7 = vsyncpa [#allocation3], 0
    // Predicated region
    $region2: #{tpu_custom_call.1} parent=1 // pred_check
      _
    $region3: #{tpu_custom_call.1} parent=1 // pred_check_branch
      %9 = sbr.rel (0) target = $region5
    $region4: #{tpu_custom_call.1} parent=1 // pred_region
      _
    $region5: #{tpu_custom_call.1} parent=1 // pred_fallthru
      _
    // Predicated region
    $region6: #{tpu_custom_call.1} parent=1 // pred_check
      _
    $region7: #{tpu_custom_call.1} parent=1 // pred_check_branch
      %11 = sbr.rel (0) target = $region9
    $region8: #{tpu_custom_call.1} parent=1 // pred_region
      _
    $region9: #{tpu_custom_call.1} parent=1 // pred_fallthru
      _
    %v12 = vld [vmem:[%s0] sm:$0xff]
    %v13 = vld [vmem:[%s0 + $0x8] sm:$0xff]
    %v14 = vld [vmem:[%s0 + $0x10] sm:$0xff]
    %v15 = vld [vmem:[%s0 + $0x18] sm:$0xff]
    %v16 = vld [vmem:[%s0 + $0x20] sm:$0xf]
    %v17 = vld [vmem:[%s1] sm:$0xff]
    %v18 = vld [vmem:[%s1 + $0x8] sm:$0x1f]
    %v19 = vld [vmem:[%s1 + $0xd] sm:$0xff]
    %v20 = vld [vmem:[%s1 + $0x15] sm:$0xff]
    %v21 = vld [vmem:[%s1 + $0x1d] sm:$0xff]
    %v22 = vld [vmem:[%s1 + $0x25] sm:$0x1]
    %vm28 = vcmask 1040384
    %v29 = vrot.slane %v12, 7
    %v30 = vrot.slane %v13, 7
    %v31 = vsel %vm28, %v29, %v30
    %v32 = vrot.slane %v14, 7
    %v33 = vsel %vm28, %v30, %v32
    %v34 = vrot.slane %v15, 7
    %v35 = vsel %vm28, %v32, %v34
    %v36 = vrot.slane %v16, 7
    %v37 = vsel %vm28, %v34, %v36
    %v43 = vsel %vm28, 0.0, %v29
    %vm44 = vcmask 1046528
    %v45 = vrot.slane %v12, 1
    %v46 = vrot.slane %v13, 1
    %v47 = vsel %vm44, %v45, %v46
    %v48 = vrot.slane %v14, 1
    %v49 = vsel %vm44, %v46, %v48
    %v50 = vrot.slane %v15, 1
    %v51 = vsel %vm44, %v48, %v50
    %v52 = vrot.slane %v16, 1
    %v53 = vsel %vm44, %v50, %v52
    %vm59 = vcmask 1042432
    %v60 = vsel %vm59, %v52, 0.0
    %v61 = vlaneseq
    %v62 = vshrl.u32 %v61, 7
    %v63 = vadd.s32 %v62, 8
    %v64 = vadd.s32 %v62, 16
    %v65 = vadd.s32 %v62, 24
    %v66 = vadd.s32 %v62, 32
    %vm67 = vcmp.eq.s32.totalorder %v62, 18
    %vm68 = vcmp.eq.s32.totalorder %v63, 18
    %vm69 = vcmp.eq.s32.totalorder %v64, 18
    %vm70 = vcmp.eq.s32.totalorder %v65, 18
    %vm71 = vcmp.eq.s32.totalorder %v66, 18
    %vm72 = vcmp.eq.s32.totalorder %v62, 17
    %vm73 = vcmp.eq.s32.totalorder %v63, 17
    %vm74 = vcmp.eq.s32.totalorder %v64, 17
    %vm75 = vcmp.eq.s32.totalorder %v65, 17
    %vm76 = vcmp.eq.s32.totalorder %v66, 17
    %v77 = vsel %vm67, 0.0, %v43
    %v78 = vsel %vm68, 0.0, %v31
    %v79 = vsel %vm69, 0.0, %v33
    %v80 = vsel %vm70, 0.0, %v35
    %v81 = vsel %vm71, 0.0, %v37
    %v82 = vsel %vm72, 0.0, %v47
    %v83 = vsel %vm73, 0.0, %v49
    %v84 = vsel %vm74, 0.0, %v51
    %v85 = vsel %vm75, 0.0, %v53
    %v86 = vsel %vm76, 0.0, %v60
    %87 = vrot.lane.b32.xlu0 %v12, 4
    %v88 = vpop.permute.xlu0 %87
    %89 = vrot.lane.b32.xlu0 %v13, 4
    %v90 = vpop.permute.xlu0 %89
    %91 = vrot.lane.b32.xlu0 %v14, 4
    %v92 = vpop.permute.xlu0 %91
    %93 = vrot.lane.b32.xlu0 %v15, 4
    %v94 = vpop.permute.xlu0 %93
    %95 = vrot.lane.b32.xlu0 %v16, 4
    %v96 = vpop.permute.xlu0 %95
    %107 = vrot.lane.b32.xlu0 %v82, 8
    %v108 = vpop.permute.xlu0 %107
    %109 = vrot.lane.b32.xlu0 %v83, 8
    %v110 = vpop.permute.xlu0 %109
    %111 = vrot.lane.b32.xlu0 %v84, 8
    %v112 = vpop.permute.xlu0 %111
    %113 = vrot.lane.b32.xlu0 %v85, 8
    %v114 = vpop.permute.xlu0 %113
    %115 = vrot.lane.b32.xlu0 %v86, 8
    %v116 = vpop.permute.xlu0 %115
    %vm122 = vcmask 31744
    %v123 = vsel %vm122, %v77, %v88
    %v124 = vsel %vm122, %v78, %v90
    %v125 = vsel %vm122, %v79, %v92
    %v126 = vsel %vm122, %v80, %v94
    %v127 = vsel %vm122, %v81, %v96
    %vm128 = vcmask 64512
    %v129 = vsel %vm128, %v123, %v108
    %v130 = vsel %vm128, %v124, %v110
    %v131 = vsel %vm128, %v125, %v112
    %v132 = vsel %vm128, %v126, %v114
    %v133 = vsel %vm128, %v127, %v116
    %vm134 = vcmask 97280
    %v135 = vsel %vm134, %v129, 1.0
    %v136 = vsel %vm134, %v130, 1.0
    %v137 = vsel %vm134, %v131, 1.0
    %v138 = vsel %vm134, %v132, 1.0
    %v139 = vsel %vm134, %v133, 1.0
    %vm140 = vcmask 105472
    %v142 = vsel %vm140, %v135, 0
    %v145 = vsel %vm140, %v136, 0
    %v148 = vsel %vm140, %v137, 0
    %v151 = vsel %vm140, %v138, 0
    %v154 = vsel %vm140, %v139, 0
    %vm156 = vcmask 1044480
    %v158 = vsel %vm156, %v18, 0
    %160 = vmatprep.subr.mxu0 0.0
    %161 = vmatpush1.msra.mxu0 0.0
    %162 = vmatprep.subr.mxu0 0.0
    %163 = vmatpush1.msra.mxu0 0.0
    %164 = vmatprep.subr.mxu0 0.0
    %165 = vmatpush1.msra.mxu0 0.0
    %166 = vmatprep.subr.mxu0 0.0
    %167 = vmatpush1.msra.mxu0 0.0
    %168 = vmatprep.subr.mxu0 0.0
    %169 = vmatpush1.msra.mxu0 0.0
    %170 = vmatprep.subr.mxu0 0.0
    %171 = vmatpush1.msra.mxu0 0.0
    %172 = vmatprep.subr.mxu0 0.0
    %173 = vmatpush1.msra.mxu0 0.0
    %174 = vmatprep.subr.mxu0 0.0
    %175 = vmatpush1.msra.mxu0 0.0
    %176 = vmatprep.subr.mxu0 0.0
    %177 = vmatpush1.msra.mxu0 0.0
    %178 = vmatprep.subr.mxu0 0.0
    %179 = vmatpush1.msra.mxu0 0.0
    %180 = vmatprep.subr.mxu0 0.0
    %181 = vmatpush1.msra.mxu0 0.0
    %182 = vmatprep.subr.mxu0 0.0
    %183 = vmatpush1.msra.mxu0 0.0
    %184 = vmatprep.subr.mxu0 0.0
    %185 = vmatpush1.msra.mxu0 0.0
    %186 = vmatprep.subr.mxu0 0.0
    %187 = vmatpush1.msra.mxu0 0.0
    %188 = vmatprep.subr.mxu0 0.0
    %189 = vmatpush1.msra.mxu0 %v158
    %190 = vmatprep.subr.mxu0 0.0
    %191 = vmatpush1.msra.mxu0 %v17
    %192 = vmatprep.subr.mxu0 0.0
    %193 = vmatpush2.msra.mxu0 0.0
    %194 = vmatprep.subr.mxu0 0.0
    %195 = vmatpush2.msra.mxu0 0.0
    %196 = vmatprep.subr.mxu0 0.0
    %197 = vmatpush2.msra.mxu0 0.0
    %198 = vmatprep.subr.mxu0 0.0
    %199 = vmatpush2.msra.mxu0 0.0
    %200 = vmatprep.subr.mxu0 0.0
    %201 = vmatpush2.msra.mxu0 0.0
    %202 = vmatprep.subr.mxu0 0.0
    %203 = vmatpush2.msra.mxu0 0.0
    %204 = vmatprep.subr.mxu0 0.0
    %205 = vmatpush2.msra.mxu0 0.0
    %206 = vmatprep.subr.mxu0 0.0
    %207 = vmatpush2.msra.mxu0 0.0
    %208 = vmatprep.subr.mxu0 0.0
    %209 = vmatpush2.msra.mxu0 0.0
    %210 = vmatprep.subr.mxu0 0.0
    %211 = vmatpush2.msra.mxu0 0.0
    %212 = vmatprep.subr.mxu0 0.0
    %213 = vmatpush2.msra.mxu0 0.0
    %214 = vmatprep.subr.mxu0 0.0
    %215 = vmatpush2.msra.mxu0 0.0
    %216 = vmatprep.subr.mxu0 0.0
    %217 = vmatpush2.msra.mxu0 0.0
    %218 = vmatprep.subr.mxu0 0.0
    %219 = vmatpush2.msra.mxu0 0.0
    %220 = vmatprep.subr.mxu0 0.0
    %221 = vmatpush2.msra.mxu0 0.0
    %222 = vmatprep.subr.mxu0 0.0
    %223 = vmatpush2.msra.mxu0 0.0
    %224 = vmatprep.mubr.f32.mxu0 0.0
    %225 = vmatmul.mubr.f32.gmra.mxu0 %v142
    %v226 = vpop.f32.mrf.mxu0
    %v227 = vadd.f32 0.0, %v226
    %v228 = vpop.f32.mrf.mxu0
    %229 = vmatprep.mubr.f32.mxu0 0.0
    %230 = vmatmul.mubr.f32.gmra.mxu0 %v145
    %v231 = vpop.f32.mrf.mxu0
    %v232 = vadd.f32 0.0, %v231
    %v233 = vpop.f32.mrf.mxu0
    %234 = vmatprep.mubr.f32.mxu0 0.0
    %235 = vmatmul.mubr.f32.gmra.mxu0 %v148
    %v236 = vpop.f32.mrf.mxu0
    %v237 = vadd.f32 0.0, %v236
    %v238 = vpop.f32.mrf.mxu0
    %239 = vmatprep.mubr.f32.mxu0 0.0
    %240 = vmatmul.mubr.f32.gmra.mxu0 %v151
    %v241 = vpop.f32.mrf.mxu0
    %v242 = vadd.f32 0.0, %v241
    %v243 = vpop.f32.mrf.mxu0
    %244 = vmatprep.mubr.f32.mxu0 0.0
    %245 = vmatmul.mubr.f32.gmra.mxu0 %v154
    %v246 = vpop.f32.mrf.mxu0
    %v247 = vadd.f32 0.0, %v246
    %v248 = vpop.f32.mrf.mxu0
    %249 = vdwg.mxu0
    %vm250 = vcmp.gt.f32.partialorder %v227, 0.0
    %vm251 = vcmp.gt.f32.partialorder %v232, 0.0
    %vm252 = vcmp.gt.f32.partialorder %v237, 0.0
    %vm253 = vcmp.gt.f32.partialorder %v242, 0.0
    %vm254 = vcmp.gt.f32.partialorder %v247, 0.0
    %v255 = vmul.f32 %v227, 0.01
    %v256 = vmul.f32 %v232, 0.01
    %v257 = vmul.f32 %v237, 0.01
    %v258 = vmul.f32 %v242, 0.01
    %v259 = vmul.f32 %v247, 0.01
    %v260 = vsel %vm250, %v227, %v255
    %v261 = vsel %vm251, %v232, %v256
    %v262 = vsel %vm252, %v237, %v257
    %v263 = vsel %vm253, %v242, %v258
    %v264 = vsel %vm254, %v247, %v259
    %v270 = vrot.slane %v260, 7
    %v271 = vrot.slane %v261, 7
    %v272 = vsel %vm28, %v270, %v271
    %v273 = vrot.slane %v262, 7
    %v274 = vsel %vm28, %v271, %v273
    %v275 = vrot.slane %v263, 7
    %v276 = vsel %vm28, %v273, %v275
    %v277 = vrot.slane %v264, 7
    %v278 = vsel %vm28, %v275, %v277
    %v284 = vsel %vm28, 0.0, %v270
    %v285 = vrot.slane %v260, 1
    %v286 = vrot.slane %v261, 1
    %v287 = vsel %vm44, %v285, %v286
    %v288 = vrot.slane %v262, 1
    %v289 = vsel %vm44, %v286, %v288
    %v290 = vrot.slane %v263, 1
    %v291 = vsel %vm44, %v288, %v290
    %v292 = vrot.slane %v264, 1
    %v293 = vsel %vm44, %v290, %v292
    %v299 = vsel %vm59, %v292, 0.0
    %v300 = vsel %vm67, 0.0, %v284
    %v301 = vsel %vm68, 0.0, %v272
    %v302 = vsel %vm69, 0.0, %v274
    %v303 = vsel %vm70, 0.0, %v276
    %v304 = vsel %vm71, 0.0, %v278
    %v305 = vsel %vm72, 0.0, %v287
    %v306 = vsel %vm73, 0.0, %v289
    %v307 = vsel %vm74, 0.0, %v291
    %v308 = vsel %vm75, 0.0, %v293
    %v309 = vsel %vm76, 0.0, %v299
    %310 = vrot.lane.b32.xlu0 %v260, 8
    %v311 = vpop.permute.xlu0 %310
    %312 = vrot.lane.b32.xlu0 %v261, 8
    %v313 = vpop.permute.xlu0 %312
    %314 = vrot.lane.b32.xlu0 %v262, 8
    %v315 = vpop.permute.xlu0 %314
    %316 = vrot.lane.b32.xlu0 %v263, 8
    %v317 = vpop.permute.xlu0 %316
    %318 = vrot.lane.b32.xlu0 %v264, 8
    %v319 = vpop.permute.xlu0 %318
    %330 = vrot.lane.b32.xlu0 %v305, 16
    %v331 = vpop.permute.xlu0 %330
    %332 = vrot.lane.b32.xlu0 %v306, 16
    %v333 = vpop.permute.xlu0 %332
    %334 = vrot.lane.b32.xlu0 %v307, 16
    %v335 = vpop.permute.xlu0 %334
    %336 = vrot.lane.b32.xlu0 %v308, 16
    %v337 = vpop.permute.xlu0 %336
    %338 = vrot.lane.b32.xlu0 %v309, 16
    %v339 = vpop.permute.xlu0 %338
    %v345 = vsel %vm128, %v300, %v311
    %v346 = vsel %vm128, %v301, %v313
    %v347 = vsel %vm128, %v302, %v315
    %v348 = vsel %vm128, %v303, %v317
    %v349 = vsel %vm128, %v304, %v319
    %vm350 = vcmask 130048
    %v351 = vsel %vm350, %v345, %v331
    %v352 = vsel %vm350, %v346, %v333
    %v353 = vsel %vm350, %v347, %v335
    %v354 = vsel %vm350, %v348, %v337
    %v355 = vsel %vm350, %v349, %v339
    %vm356 = vcmask 195584
    %v357 = vsel %vm356, %v351, 1.0
    %v358 = vsel %vm356, %v352, 1.0
    %v359 = vsel %vm356, %v353, 1.0
    %v360 = vsel %vm356, %v354, 1.0
    %v361 = vsel %vm356, %v355, 1.0
    %367 = vrot.lane.b32.xlu0 %v227, 120
    %v368 = vpop.permute.xlu0 %367
    %369 = vrot.lane.b32.xlu0 %v232, 120
    %v370 = vpop.permute.xlu0 %369
    %371 = vrot.lane.b32.xlu0 %v237, 120
    %v372 = vpop.permute.xlu0 %371
    %373 = vrot.lane.b32.xlu0 %v242, 120
    %v374 = vpop.permute.xlu0 %373
    %375 = vrot.lane.b32.xlu0 %v247, 120
    %v376 = vpop.permute.xlu0 %375
    %vm382 = vcmask 203776
    %v384 = vsel %vm382, %v357, 0
    %v387 = vsel %vm382, %v358, 0
    %v390 = vsel %vm382, %v359, 0
    %v393 = vsel %vm382, %v360, 0
    %v396 = vsel %vm382, %v361, 0
    %v399 = vsel %vm28, %v22, 0
    %401 = vmatprep.subr.mxu0 0.0
    %402 = vmatpush1.msra.mxu0 0.0
    %403 = vmatprep.subr.mxu0 0.0
    %404 = vmatpush1.msra.mxu0 0.0
    %405 = vmatprep.subr.mxu0 0.0
    %406 = vmatpush1.msra.mxu0 0.0
    %407 = vmatprep.subr.mxu0 0.0
    %408 = vmatpush1.msra.mxu0 0.0
    %409 = vmatprep.subr.mxu0 0.0
    %410 = vmatpush1.msra.mxu0 0.0
    %411 = vmatprep.subr.mxu0 0.0
    %412 = vmatpush1.msra.mxu0 0.0
    %413 = vmatprep.subr.mxu0 0.0
    %414 = vmatpush1.msra.mxu0 0.0
    %415 = vmatprep.subr.mxu0 0.0
    %416 = vmatpush1.msra.mxu0 0.0
    %417 = vmatprep.subr.mxu0 0.0
    %418 = vmatpush1.msra.mxu0 0.0
    %419 = vmatprep.subr.mxu0 0.0
    %420 = vmatpush1.msra.mxu0 0.0
    %421 = vmatprep.subr.mxu0 0.0
    %422 = vmatpush1.msra.mxu0 0.0
    %423 = vmatprep.subr.mxu0 0.0
    %424 = vmatpush1.msra.mxu0 0.0
    %425 = vmatprep.subr.mxu0 0.0
    %426 = vmatpush1.msra.mxu0 %v399
    %427 = vmatprep.subr.mxu0 0.0
    %428 = vmatpush1.msra.mxu0 %v21
    %429 = vmatprep.subr.mxu0 0.0
    %430 = vmatpush1.msra.mxu0 %v20
    %431 = vmatprep.subr.mxu0 0.0
    %432 = vmatpush1.msra.mxu0 %v19
    %433 = vmatprep.subr.mxu0 0.0
    %434 = vmatpush2.msra.mxu0 0.0
    %435 = vmatprep.subr.mxu0 0.0
    %436 = vmatpush2.msra.mxu0 0.0
    %437 = vmatprep.subr.mxu0 0.0
    %438 = vmatpush2.msra.mxu0 0.0
    %439 = vmatprep.subr.mxu0 0.0
    %440 = vmatpush2.msra.mxu0 0.0
    %441 = vmatprep.subr.mxu0 0.0
    %442 = vmatpush2.msra.mxu0 0.0
    %443 = vmatprep.subr.mxu0 0.0
    %444 = vmatpush2.msra.mxu0 0.0
    %445 = vmatprep.subr.mxu0 0.0
    %446 = vmatpush2.msra.mxu0 0.0
    %447 = vmatprep.subr.mxu0 0.0
    %448 = vmatpush2.msra.mxu0 0.0
    %449 = vmatprep.subr.mxu0 0.0
    %450 = vmatpush2.msra.mxu0 0.0
    %451 = vmatprep.subr.mxu0 0.0
    %452 = vmatpush2.msra.mxu0 0.0
    %453 = vmatprep.subr.mxu0 0.0
    %454 = vmatpush2.msra.mxu0 0.0
    %455 = vmatprep.subr.mxu0 0.0
    %456 = vmatpush2.msra.mxu0 0.0
    %457 = vmatprep.subr.mxu0 0.0
    %458 = vmatpush2.msra.mxu0 0.0
    %459 = vmatprep.subr.mxu0 0.0
    %460 = vmatpush2.msra.mxu0 0.0
    %461 = vmatprep.subr.mxu0 0.0
    %462 = vmatpush2.msra.mxu0 0.0
    %463 = vmatprep.subr.mxu0 0.0
    %464 = vmatpush2.msra.mxu0 0.0
    %465 = vmatprep.mubr.f32.mxu0 0.0
    %466 = vmatmul.mubr.f32.gmra.mxu0 %v384
    %v467 = vpop.f32.mrf.mxu0
    %v468 = vadd.f32 %v368, %v467
    %v469 = vpop.f32.mrf.mxu0
    %470 = vmatprep.mubr.f32.mxu0 0.0
    %471 = vmatmul.mubr.f32.gmra.mxu0 %v387
    %v472 = vpop.f32.mrf.mxu0
    %v473 = vadd.f32 %v370, %v472
    %v474 = vpop.f32.mrf.mxu0
    %475 = vmatprep.mubr.f32.mxu0 0.0
    %476 = vmatmul.mubr.f32.gmra.mxu0 %v390
    %v477 = vpop.f32.mrf.mxu0
    %v478 = vadd.f32 %v372, %v477
    %v479 = vpop.f32.mrf.mxu0
    %480 = vmatprep.mubr.f32.mxu0 0.0
    %481 = vmatmul.mubr.f32.gmra.mxu0 %v393
    %v482 = vpop.f32.mrf.mxu0
    %v483 = vadd.f32 %v374, %v482
    %v484 = vpop.f32.mrf.mxu0
    %485 = vmatprep.mubr.f32.mxu0 0.0
    %486 = vmatmul.mubr.f32.gmra.mxu0 %v396
    %v487 = vpop.f32.mrf.mxu0
    %v488 = vadd.f32 %v376, %v487
    %v489 = vpop.f32.mrf.mxu0
    %490 = vdwg.mxu0
    %vm491 = vcmp.gt.f32.partialorder %v468, 0.0
    %vm492 = vcmp.gt.f32.partialorder %v473, 0.0
    %vm493 = vcmp.gt.f32.partialorder %v478, 0.0
    %vm494 = vcmp.gt.f32.partialorder %v483, 0.0
    %vm495 = vcmp.gt.f32.partialorder %v488, 0.0
    %v496 = vmul.f32 %v468, 0.01
    %v497 = vmul.f32 %v473, 0.01
    %v498 = vmul.f32 %v478, 0.01
    %v499 = vmul.f32 %v483, 0.01
    %v500 = vmul.f32 %v488, 0.01
    %v501 = vsel %vm491, %v468, %v496
    %v502 = vsel %vm492, %v473, %v497
    %v503 = vsel %vm493, %v478, %v498
    %v504 = vsel %vm494, %v483, %v499
    %v505 = vsel %vm495, %v488, %v500
    %v511 = vrot.slane %v501, 1
    %v512 = vrot.slane %v502, 1
    %v513 = vsel %vm44, %v511, %v512
    %v514 = vrot.slane %v503, 1
    %v515 = vsel %vm44, %v512, %v514
    %v516 = vrot.slane %v504, 1
    %v517 = vsel %vm44, %v514, %v516
    %v518 = vrot.slane %v505, 1
    %v519 = vsel %vm44, %v516, %v518
    %v525 = vmax.f32 %v501, %v513
    %v526 = vmax.f32 %v502, %v515
    %v527 = vmax.f32 %v503, %v517
    %v528 = vmax.f32 %v504, %v519
    %v529 = vmax.f32 %v505, %v518
    %v535 = vrot.slane %v525, 1
    %v536 = vrot.slane %v526, 1
    %v537 = vsel %vm44, %v535, %v536
    %v538 = vrot.slane %v527, 1
    %v539 = vsel %vm44, %v536, %v538
    %v540 = vrot.slane %v528, 1
    %v541 = vsel %vm44, %v538, %v540
    %v542 = vrot.slane %v529, 1
    %v543 = vsel %vm44, %v540, %v542
    %v549 = vmax.f32 %v501, %v537
    %v550 = vmax.f32 %v502, %v539
    %v551 = vmax.f32 %v503, %v541
    %v552 = vmax.f32 %v504, %v543
    %v553 = vmax.f32 %v505, %v542
    %v554 = vlaneseq
    %v555 = vand.u32 %v554, 127
    %v556 = vmul.u32 %v62, 3
    %v557 = vmul.u32 %v63, 3
    %vm558 = vcmp.eq.s32.totalorder %v555, %v556
    %vm559 = vcmp.eq.s32.totalorder %v555, %v557
    %v560 = vsel %vm558, 1, 0
    %v561 = vsel %vm559, 1, 0
    %v562 = vcvt.s32.f32 %v560
    %v563 = vcvt.s32.f32 %v561
    %vm564 = vcmask 277504
    %v566 = vsel %vm564, %v562, 0
    %v569 = vsel %vm564, %v563, 0
    %vm571 = vcmask 1041408
    %v573 = vsel %vm571, %v553, 0
    %575 = vmatprep.subr.mxu0 0.0
    %576 = vmatpush1.msra.mxu0 0.0
    %577 = vmatprep.subr.mxu0 0.0
    %578 = vmatpush1.msra.mxu0 0.0
    %579 = vmatprep.subr.mxu0 0.0
    %580 = vmatpush1.msra.mxu0 0.0
    %581 = vmatprep.subr.mxu0 0.0
    %582 = vmatpush1.msra.mxu0 0.0
    %583 = vmatprep.subr.mxu0 0.0
    %584 = vmatpush1.msra.mxu0 0.0
    %585 = vmatprep.subr.mxu0 0.0
    %586 = vmatpush1.msra.mxu0 0.0
    %587 = vmatprep.subr.mxu0 0.0
    %588 = vmatpush1.msra.mxu0 0.0
    %589 = vmatprep.subr.mxu0 0.0
    %590 = vmatpush1.msra.mxu0 0.0
    %591 = vmatprep.subr.mxu0 0.0
    %592 = vmatpush1.msra.mxu0 0.0
    %593 = vmatprep.subr.mxu0 0.0
    %594 = vmatpush1.msra.mxu0 0.0
    %595 = vmatprep.subr.mxu0 0.0
    %596 = vmatpush1.msra.mxu0 0.0
    %597 = vmatprep.subr.mxu0 0.0
    %598 = vmatpush1.msra.mxu0 %v573
    %599 = vmatprep.subr.mxu0 0.0
    %600 = vmatpush1.msra.mxu0 %v552
    %601 = vmatprep.subr.mxu0 0.0
    %602 = vmatpush1.msra.mxu0 %v551
    %603 = vmatprep.subr.mxu0 0.0
    %604 = vmatpush1.msra.mxu0 %v550
    %605 = vmatprep.subr.mxu0 0.0
    %606 = vmatpush1.msra.mxu0 %v549
    %607 = vmatprep.subr.mxu0 0.0
    %608 = vmatpush2.msra.mxu0 0.0
    %609 = vmatprep.subr.mxu0 0.0
    %610 = vmatpush2.msra.mxu0 0.0
    %611 = vmatprep.subr.mxu0 0.0
    %612 = vmatpush2.msra.mxu0 0.0
    %613 = vmatprep.subr.mxu0 0.0
    %614 = vmatpush2.msra.mxu0 0.0
    %615 = vmatprep.subr.mxu0 0.0
    %616 = vmatpush2.msra.mxu0 0.0
    %617 = vmatprep.subr.mxu0 0.0
    %618 = vmatpush2.msra.mxu0 0.0
    %619 = vmatprep.subr.mxu0 0.0
    %620 = vmatpush2.msra.mxu0 0.0
    %621 = vmatprep.subr.mxu0 0.0
    %622 = vmatpush2.msra.mxu0 0.0
    %623 = vmatprep.subr.mxu0 0.0
    %624 = vmatpush2.msra.mxu0 0.0
    %625 = vmatprep.subr.mxu0 0.0
    %626 = vmatpush2.msra.mxu0 0.0
    %627 = vmatprep.subr.mxu0 0.0
    %628 = vmatpush2.msra.mxu0 0.0
    %629 = vmatprep.subr.mxu0 0.0
    %630 = vmatpush2.msra.mxu0 0.0
    %631 = vmatprep.subr.mxu0 0.0
    %632 = vmatpush2.msra.mxu0 0.0
    %633 = vmatprep.subr.mxu0 0.0
    %634 = vmatpush2.msra.mxu0 0.0
    %635 = vmatprep.subr.mxu0 0.0
    %636 = vmatpush2.msra.mxu0 0.0
    %637 = vmatprep.subr.mxu0 0.0
    %638 = vmatpush2.msra.mxu0 0.0
    %639 = vmatprep.mubr.f32.mxu0 0.0
    %640 = vmatmul.mubr.f32.gmra.mxu0 %v566
    %v641 = vpop.f32.mrf.mxu0
    %v642 = vadd.f32 0.0, %v641
    %v643 = vpop.f32.mrf.mxu0
    %644 = vmatprep.mubr.f32.mxu0 0.0
    %645 = vmatmul.mubr.f32.gmra.mxu0 %v569
    %v646 = vpop.f32.mrf.mxu0
    %v647 = vadd.f32 0.0, %v646
    %v648 = vpop.f32.mrf.mxu0
    %649 = vdwg.mxu0
    %v650 = vld [vmem:[%s1 + $0x26] sm:$0xff]
    %v651 = vld [vmem:[%s1 + $0x2e] sm:$0xff]
    %v652 = vld [vmem:[%s1 + $0x36] sm:$0xff]
    %v653 = vld [vmem:[%s1 + $0x3e] sm:$0x1]
    %v654 = vld [vmem:[%s1 + $0x3f] sm:$0xff]
    %v655 = vld [vmem:[%s1 + $0x47] sm:$0x1f]
    %v658 = vrot.slane %v642, 7
    %v659 = vrot.slane %v647, 7
    %v660 = vsel %vm28, %v658, %v659
    %v663 = vsel %vm28, 0.0, %v658
    %v664 = vrot.slane %v642, 1
    %v665 = vrot.slane %v647, 1
    %v666 = vsel %vm44, %v664, %v665
    %v669 = vsel %vm59, %v665, 0.0
    %vm670 = vcmp.eq.s32.totalorder %v62, 6
    %vm671 = vcmp.eq.s32.totalorder %v63, 6
    %vm672 = vcmp.eq.s32.totalorder %v62, 5
    %vm673 = vcmp.eq.s32.totalorder %v63, 5
    %v674 = vsel %vm670, 0.0, %v663
    %v675 = vsel %vm671, 0.0, %v660
    %v676 = vsel %vm672, 0.0, %v666
    %v677 = vsel %vm673, 0.0, %v669
    %678 = vrot.lane.b32.xlu0 %v642, 8
    %v679 = vpop.permute.xlu0 %678
    %680 = vrot.lane.b32.xlu0 %v647, 8
    %v681 = vpop.permute.xlu0 %680
    %686 = vrot.lane.b32.xlu0 %v676, 16
    %v687 = vpop.permute.xlu0 %686
    %688 = vrot.lane.b32.xlu0 %v677, 16
    %v689 = vpop.permute.xlu0 %688
    %v692 = vsel %vm128, %v674, %v679
    %v693 = vsel %vm128, %v675, %v681
    %v694 = vsel %vm350, %v692, %v687
    %v695 = vsel %vm350, %v693, %v689
    %v696 = vsel %vm356, %v694, 1.0
    %v697 = vsel %vm356, %v695, 1.0
    %v699 = vsel %vm382, %v696, 0
    %v702 = vsel %vm382, %v697, 0
    %v705 = vsel %vm28, %v653, 0
    %707 = vmatprep.subr.mxu0 0.0
    %708 = vmatpush1.msra.mxu0 0.0
    %709 = vmatprep.subr.mxu0 0.0
    %710 = vmatpush1.msra.mxu0 0.0
    %711 = vmatprep.subr.mxu0 0.0
    %712 = vmatpush1.msra.mxu0 0.0
    %713 = vmatprep.subr.mxu0 0.0
    %714 = vmatpush1.msra.mxu0 0.0
    %715 = vmatprep.subr.mxu0 0.0
    %716 = vmatpush1.msra.mxu0 0.0
    %717 = vmatprep.subr.mxu0 0.0
    %718 = vmatpush1.msra.mxu0 0.0
    %719 = vmatprep.subr.mxu0 0.0
    %720 = vmatpush1.msra.mxu0 0.0
    %721 = vmatprep.subr.mxu0 0.0
    %722 = vmatpush1.msra.mxu0 0.0
    %723 = vmatprep.subr.mxu0 0.0
    %724 = vmatpush1.msra.mxu0 0.0
    %725 = vmatprep.subr.mxu0 0.0
    %726 = vmatpush1.msra.mxu0 0.0
    %727 = vmatprep.subr.mxu0 0.0
    %728 = vmatpush1.msra.mxu0 0.0
    %729 = vmatprep.subr.mxu0 0.0
    %730 = vmatpush1.msra.mxu0 0.0
    %731 = vmatprep.subr.mxu0 0.0
    %732 = vmatpush1.msra.mxu0 %v705
    %733 = vmatprep.subr.mxu0 0.0
    %734 = vmatpush1.msra.mxu0 %v652
    %735 = vmatprep.subr.mxu0 0.0
    %736 = vmatpush1.msra.mxu0 %v651
    %737 = vmatprep.subr.mxu0 0.0
    %738 = vmatpush1.msra.mxu0 %v650
    %739 = vmatprep.subr.mxu0 0.0
    %740 = vmatpush2.msra.mxu0 0.0
    %741 = vmatprep.subr.mxu0 0.0
    %742 = vmatpush2.msra.mxu0 0.0
    %743 = vmatprep.subr.mxu0 0.0
    %744 = vmatpush2.msra.mxu0 0.0
    %745 = vmatprep.subr.mxu0 0.0
    %746 = vmatpush2.msra.mxu0 0.0
    %747 = vmatprep.subr.mxu0 0.0
    %748 = vmatpush2.msra.mxu0 0.0
    %749 = vmatprep.subr.mxu0 0.0
    %750 = vmatpush2.msra.mxu0 0.0
    %751 = vmatprep.subr.mxu0 0.0
    %752 = vmatpush2.msra.mxu0 0.0
    %753 = vmatprep.subr.mxu0 0.0
    %754 = vmatpush2.msra.mxu0 0.0
    %755 = vmatprep.subr.mxu0 0.0
    %756 = vmatpush2.msra.mxu0 0.0
    %757 = vmatprep.subr.mxu0 0.0
    %758 = vmatpush2.msra.mxu0 0.0
    %759 = vmatprep.subr.mxu0 0.0
    %760 = vmatpush2.msra.mxu0 0.0
    %761 = vmatprep.subr.mxu0 0.0
    %762 = vmatpush2.msra.mxu0 0.0
    %763 = vmatprep.subr.mxu0 0.0
    %764 = vmatpush2.msra.mxu0 0.0
    %765 = vmatprep.subr.mxu0 0.0
    %766 = vmatpush2.msra.mxu0 0.0
    %767 = vmatprep.subr.mxu0 0.0
    %768 = vmatpush2.msra.mxu0 0.0
    %769 = vmatprep.subr.mxu0 0.0
    %770 = vmatpush2.msra.mxu0 0.0
    %771 = vmatprep.mubr.f32.mxu0 0.0
    %772 = vmatmul.mubr.f32.gmra.mxu0 %v699
    %v773 = vpop.f32.mrf.mxu0
    %v774 = vadd.f32 0.0, %v773
    %v775 = vpop.f32.mrf.mxu0
    %776 = vmatprep.mubr.f32.mxu0 0.0
    %777 = vmatmul.mubr.f32.gmra.mxu0 %v702
    %v778 = vpop.f32.mrf.mxu0
    %v779 = vadd.f32 0.0, %v778
    %v780 = vpop.f32.mrf.mxu0
    %781 = vdwg.mxu0
    %vm782 = vcmp.gt.f32.partialorder %v774, 0.0
    %vm783 = vcmp.gt.f32.partialorder %v779, 0.0
    %v784 = vmul.f32 %v774, 0.01
    %v785 = vmul.f32 %v779, 0.01
    %v786 = vsel %vm782, %v774, %v784
    %v787 = vsel %vm783, %v779, %v785
    %v790 = vrot.slane %v786, 7
    %v791 = vrot.slane %v787, 7
    %v792 = vsel %vm28, %v790, %v791
    %v795 = vsel %vm28, 0.0, %v790
    %v796 = vrot.slane %v786, 1
    %v797 = vrot.slane %v787, 1
    %v798 = vsel %vm44, %v796, %v797
    %v801 = vsel %vm59, %v797, 0.0
    %v802 = vsel %vm670, 0.0, %v795
    %v803 = vsel %vm671, 0.0, %v792
    %v804 = vsel %vm672, 0.0, %v798
    %v805 = vsel %vm673, 0.0, %v801
    %806 = vrot.lane.b32.xlu0 %v786, 4
    %v807 = vpop.permute.xlu0 %806
    %808 = vrot.lane.b32.xlu0 %v787, 4
    %v809 = vpop.permute.xlu0 %808
    %814 = vrot.lane.b32.xlu0 %v804, 8
    %v815 = vpop.permute.xlu0 %814
    %816 = vrot.lane.b32.xlu0 %v805, 8
    %v817 = vpop.permute.xlu0 %816
    %v820 = vsel %vm122, %v802, %v807
    %v821 = vsel %vm122, %v803, %v809
    %v822 = vsel %vm128, %v820, %v815
    %v823 = vsel %vm128, %v821, %v817
    %v824 = vsel %vm134, %v822, 1.0
    %v825 = vsel %vm134, %v823, 1.0
    %828 = vrot.lane.b32.xlu0 %v774, 124
    %v829 = vpop.permute.xlu0 %828
    %830 = vrot.lane.b32.xlu0 %v779, 124
    %v831 = vpop.permute.xlu0 %830
    %v835 = vsel %vm140, %v824, 0
    %v838 = vsel %vm140, %v825, 0
    %v841 = vsel %vm156, %v655, 0
    %843 = vmatprep.subr.mxu0 0.0
    %844 = vmatpush1.msra.mxu0 0.0
    %845 = vmatprep.subr.mxu0 0.0
    %846 = vmatpush1.msra.mxu0 0.0
    %847 = vmatprep.subr.mxu0 0.0
    %848 = vmatpush1.msra.mxu0 0.0
    %849 = vmatprep.subr.mxu0 0.0
    %850 = vmatpush1.msra.mxu0 0.0
    %851 = vmatprep.subr.mxu0 0.0
    %852 = vmatpush1.msra.mxu0 0.0
    %853 = vmatprep.subr.mxu0 0.0
    %854 = vmatpush1.msra.mxu0 0.0
    %855 = vmatprep.subr.mxu0 0.0
    %856 = vmatpush1.msra.mxu0 0.0
    %857 = vmatprep.subr.mxu0 0.0
    %858 = vmatpush1.msra.mxu0 0.0
    %859 = vmatprep.subr.mxu0 0.0
    %860 = vmatpush1.msra.mxu0 0.0
    %861 = vmatprep.subr.mxu0 0.0
    %862 = vmatpush1.msra.mxu0 0.0
    %863 = vmatprep.subr.mxu0 0.0
    %864 = vmatpush1.msra.mxu0 0.0
    %865 = vmatprep.subr.mxu0 0.0
    %866 = vmatpush1.msra.mxu0 0.0
    %867 = vmatprep.subr.mxu0 0.0
    %868 = vmatpush1.msra.mxu0 0.0
    %869 = vmatprep.subr.mxu0 0.0
    %870 = vmatpush1.msra.mxu0 0.0
    %871 = vmatprep.subr.mxu0 0.0
    %872 = vmatpush1.msra.mxu0 %v841
    %873 = vmatprep.subr.mxu0 0.0
    %874 = vmatpush1.msra.mxu0 %v654
    %875 = vmatprep.subr.mxu0 0.0
    %876 = vmatpush2.msra.mxu0 0.0
    %877 = vmatprep.subr.mxu0 0.0
    %878 = vmatpush2.msra.mxu0 0.0
    %879 = vmatprep.subr.mxu0 0.0
    %880 = vmatpush2.msra.mxu0 0.0
    %881 = vmatprep.subr.mxu0 0.0
    %882 = vmatpush2.msra.mxu0 0.0
    %883 = vmatprep.subr.mxu0 0.0
    %884 = vmatpush2.msra.mxu0 0.0
    %885 = vmatprep.subr.mxu0 0.0
    %886 = vmatpush2.msra.mxu0 0.0
    %887 = vmatprep.subr.mxu0 0.0
    %888 = vmatpush2.msra.mxu0 0.0
    %889 = vmatprep.subr.mxu0 0.0
    %890 = vmatpush2.msra.mxu0 0.0
    %891 = vmatprep.subr.mxu0 0.0
    %892 = vmatpush2.msra.mxu0 0.0
    %893 = vmatprep.subr.mxu0 0.0
    %894 = vmatpush2.msra.mxu0 0.0
    %895 = vmatprep.subr.mxu0 0.0
    %896 = vmatpush2.msra.mxu0 0.0
    %897 = vmatprep.subr.mxu0 0.0
    %898 = vmatpush2.msra.mxu0 0.0
    %899 = vmatprep.subr.mxu0 0.0
    %900 = vmatpush2.msra.mxu0 0.0
    %901 = vmatprep.subr.mxu0 0.0
    %902 = vmatpush2.msra.mxu0 0.0
    %903 = vmatprep.subr.mxu0 0.0
    %904 = vmatpush2.msra.mxu0 0.0
    %905 = vmatprep.subr.mxu0 0.0
    %906 = vmatpush2.msra.mxu0 0.0
    %907 = vmatprep.mubr.f32.mxu0 0.0
    %908 = vmatmul.mubr.f32.gmra.mxu0 %v835
    %v909 = vpop.f32.mrf.mxu0
    %v910 = vadd.f32 %v829, %v909
    %v911 = vpop.f32.mrf.mxu0
    %912 = vmatprep.mubr.f32.mxu0 0.0
    %913 = vmatmul.mubr.f32.gmra.mxu0 %v838
    %v914 = vpop.f32.mrf.mxu0
    %v915 = vadd.f32 %v831, %v914
    %v916 = vpop.f32.mrf.mxu0
    %917 = vdwg.mxu0
    %vm918 = vcmp.gt.f32.partialorder %v910, 0.0
    %vm919 = vcmp.gt.f32.partialorder %v915, 0.0
    %v920 = vmul.f32 %v910, 0.01
    %v921 = vmul.f32 %v915, 0.01
    %v922 = vsel %vm918, %v910, %v920
    %v923 = vsel %vm919, %v915, %v921
    %v926 = vrot.slane %v922, 1
    %v927 = vrot.slane %v923, 1
    %v928 = vsel %vm44, %v926, %v927
    %v931 = vmax.f32 %v922, %v928
    %v932 = vmax.f32 %v923, %v927
    %v935 = vrot.slane %v931, 1
    %v936 = vrot.slane %v932, 1
    %v937 = vsel %vm44, %v935, %v936
    %v940 = vmax.f32 %v922, %v937
    %v941 = vmax.f32 %v923, %v936
    %vm942 = vcmask 80896
    %v943 = vsel %vm942, %v562, 0
    %v946 = vsel %vm571, %v941, 0
    %948 = vmatprep.subr.mxu0 0.0
    %949 = vmatpush1.msra.mxu0 0.0
    %950 = vmatprep.subr.mxu0 0.0
    %951 = vmatpush1.msra.mxu0 0.0
    %952 = vmatprep.subr.mxu0 0.0
    %953 = vmatpush1.msra.mxu0 0.0
    %954 = vmatprep.subr.mxu0 0.0
    %955 = vmatpush1.msra.mxu0 0.0
    %956 = vmatprep.subr.mxu0 0.0
    %957 = vmatpush1.msra.mxu0 0.0
    %958 = vmatprep.subr.mxu0 0.0
    %959 = vmatpush1.msra.mxu0 0.0
    %960 = vmatprep.subr.mxu0 0.0
    %961 = vmatpush1.msra.mxu0 0.0
    %962 = vmatprep.subr.mxu0 0.0
    %963 = vmatpush1.msra.mxu0 0.0
    %964 = vmatprep.subr.mxu0 0.0
    %965 = vmatpush1.msra.mxu0 0.0
    %966 = vmatprep.subr.mxu0 0.0
    %967 = vmatpush1.msra.mxu0 0.0
    %968 = vmatprep.subr.mxu0 0.0
    %969 = vmatpush1.msra.mxu0 0.0
    %970 = vmatprep.subr.mxu0 0.0
    %971 = vmatpush1.msra.mxu0 0.0
    %972 = vmatprep.subr.mxu0 0.0
    %973 = vmatpush1.msra.mxu0 0.0
    %974 = vmatprep.subr.mxu0 0.0
    %975 = vmatpush1.msra.mxu0 0.0
    %976 = vmatprep.subr.mxu0 0.0
    %977 = vmatpush1.msra.mxu0 %v946
    %978 = vmatprep.subr.mxu0 0.0
    %979 = vmatpush1.msra.mxu0 %v940
    %980 = vmatprep.subr.mxu0 0.0
    %981 = vmatpush2.msra.mxu0 0.0
    %982 = vmatprep.subr.mxu0 0.0
    %983 = vmatpush2.msra.mxu0 0.0
    %984 = vmatprep.subr.mxu0 0.0
    %985 = vmatpush2.msra.mxu0 0.0
    %986 = vmatprep.subr.mxu0 0.0
    %987 = vmatpush2.msra.mxu0 0.0
    %988 = vmatprep.subr.mxu0 0.0
    %989 = vmatpush2.msra.mxu0 0.0
    %990 = vmatprep.subr.mxu0 0.0
    %991 = vmatpush2.msra.mxu0 0.0
    %992 = vmatprep.subr.mxu0 0.0
    %993 = vmatpush2.msra.mxu0 0.0
    %994 = vmatprep.subr.mxu0 0.0
    %995 = vmatpush2.msra.mxu0 0.0
    %996 = vmatprep.subr.mxu0 0.0
    %997 = vmatpush2.msra.mxu0 0.0
    %998 = vmatprep.subr.mxu0 0.0
    %999 = vmatpush2.msra.mxu0 0.0
    %1000 = vmatprep.subr.mxu0 0.0
    %1001 = vmatpush2.msra.mxu0 0.0
    %1002 = vmatprep.subr.mxu0 0.0
    %1003 = vmatpush2.msra.mxu0 0.0
    %1004 = vmatprep.subr.mxu0 0.0
    %1005 = vmatpush2.msra.mxu0 0.0
    %1006 = vmatprep.subr.mxu0 0.0
    %1007 = vmatpush2.msra.mxu0 0.0
    %1008 = vmatprep.subr.mxu0 0.0
    %1009 = vmatpush2.msra.mxu0 0.0
    %1010 = vmatprep.subr.mxu0 0.0
    %1011 = vmatpush2.msra.mxu0 0.0
    %1012 = vmatprep.mubr.f32.mxu0 0.0
    %1013 = vmatmul.mubr.f32.gmra.mxu0 %v943
    %v1014 = vpop.f32.mrf.mxu0
    %v1015 = vadd.f32 0.0, %v1014
    %v1016 = vpop.f32.mrf.mxu0
    %1017 = vdwg.mxu0
    %v1018 = vld [vmem:[%s1 + $0x4c] sm:$0x1]
    %v1020 = vsel %vm122, %v1018, 0
    %v1023 = vsel %vm122, %v1015, 0
    %1025 = vmatprep.subr.mxu0 0.0
    %1026 = vmatpush1.xpose.msra.mxu0 0.0
    %1027 = vmatprep.subr.mxu0 0.0
    %1028 = vmatpush1.xpose.msra.mxu0 0.0
    %1029 = vmatprep.subr.mxu0 0.0
    %1030 = vmatpush1.xpose.msra.mxu0 0.0
    %1031 = vmatprep.subr.mxu0 0.0
    %1032 = vmatpush1.xpose.msra.mxu0 0.0
    %1033 = vmatprep.subr.mxu0 0.0
    %1034 = vmatpush1.xpose.msra.mxu0 0.0
    %1035 = vmatprep.subr.mxu0 0.0
    %1036 = vmatpush1.xpose.msra.mxu0 0.0
    %1037 = vmatprep.subr.mxu0 0.0
    %1038 = vmatpush1.xpose.msra.mxu0 0.0
    %1039 = vmatprep.subr.mxu0 0.0
    %1040 = vmatpush1.xpose.msra.mxu0 0.0
    %1041 = vmatprep.subr.mxu0 0.0
    %1042 = vmatpush1.xpose.msra.mxu0 0.0
    %1043 = vmatprep.subr.mxu0 0.0
    %1044 = vmatpush1.xpose.msra.mxu0 0.0
    %1045 = vmatprep.subr.mxu0 0.0
    %1046 = vmatpush1.xpose.msra.mxu0 0.0
    %1047 = vmatprep.subr.mxu0 0.0
    %1048 = vmatpush1.xpose.msra.mxu0 0.0
    %1049 = vmatprep.subr.mxu0 0.0
    %1050 = vmatpush1.xpose.msra.mxu0 0.0
    %1051 = vmatprep.subr.mxu0 0.0
    %1052 = vmatpush1.xpose.msra.mxu0 0.0
    %1053 = vmatprep.subr.mxu0 0.0
    %1054 = vmatpush1.xpose.msra.mxu0 0.0
    %1055 = vmatprep.subr.mxu0 0.0
    %1056 = vmatpush1.xpose.msra.mxu0 %v1023
    %1057 = vmatprep.subr.mxu0 0.0
    %1058 = vmatpush2.xpose.msra.mxu0 0.0
    %1059 = vmatprep.subr.mxu0 0.0
    %1060 = vmatpush2.xpose.msra.mxu0 0.0
    %1061 = vmatprep.subr.mxu0 0.0
    %1062 = vmatpush2.xpose.msra.mxu0 0.0
    %1063 = vmatprep.subr.mxu0 0.0
    %1064 = vmatpush2.xpose.msra.mxu0 0.0
    %1065 = vmatprep.subr.mxu0 0.0
    %1066 = vmatpush2.xpose.msra.mxu0 0.0
    %1067 = vmatprep.subr.mxu0 0.0
    %1068 = vmatpush2.xpose.msra.mxu0 0.0
    %1069 = vmatprep.subr.mxu0 0.0
    %1070 = vmatpush2.xpose.msra.mxu0 0.0
    %1071 = vmatprep.subr.mxu0 0.0
    %1072 = vmatpush2.xpose.msra.mxu0 0.0
    %1073 = vmatprep.subr.mxu0 0.0
    %1074 = vmatpush2.xpose.msra.mxu0 0.0
    %1075 = vmatprep.subr.mxu0 0.0
    %1076 = vmatpush2.xpose.msra.mxu0 0.0
    %1077 = vmatprep.subr.mxu0 0.0
    %1078 = vmatpush2.xpose.msra.mxu0 0.0
    %1079 = vmatprep.subr.mxu0 0.0
    %1080 = vmatpush2.xpose.msra.mxu0 0.0
    %1081 = vmatprep.subr.mxu0 0.0
    %1082 = vmatpush2.xpose.msra.mxu0 0.0
    %1083 = vmatprep.subr.mxu0 0.0
    %1084 = vmatpush2.xpose.msra.mxu0 0.0
    %1085 = vmatprep.subr.mxu0 0.0
    %1086 = vmatpush2.xpose.msra.mxu0 0.0
    %1087 = vmatprep.subr.mxu0 0.0
    %1088 = vmatpush2.xpose.msra.mxu0 0.0
    %1089 = vmatprep.mubr.f32.mxu0 0.0
    %1090 = vmatmul.mubr.f32.gmra.mxu0 %v1020
    %v1091 = vpop.f32.mrf.mxu0
    %v1092 = vadd.f32 0.0, %v1091
    %v1093 = vpop.f32.mrf.mxu0
    %1094 = vdwg.mxu0
    %v1095 = vxor.u32 %v1092, 2147483648
    %v1096 = vmul.f32 %v1095, 1.442695
    %v1097 = vpow.pop %v1096
    %v1098 = vadd.f32 %v1097, 1.0
    %v1099 = vrcp.pop %v1098
    %v1100 = vmul.f32 1.0, %v1099
    %vm1101 = vcmask 24576
    %1102 = vst.msk [vmem:[#allocation2] sm:$0x1] %vm1101, %v1100
    // Predicated region
    $region10: #{tpu_custom_call.1} parent=1 // pred_check
      _
    $region11: #{tpu_custom_call.1} parent=1 // pred_check_branch
      %1104 = sbr.rel (0) target = $region13
    $region12: #{tpu_custom_call.1} parent=1 // pred_region
      %s1106 = ssub.s32 16, 16
      %1107 = vsyncadd [#allocation3], %s1106
      %s1109 = sshll.u32 [#allocation2], 4
      %s1110 = int_to_ptr.vmem [resolvable:$true] %s1109
      %1112 = dma.vmem_to_hbm [thread:$0]  %s1110, 16, %s2, [#allocation3]
    $region13: #{tpu_custom_call.1} parent=1 // pred_fallthru
      _
    // Predicated region
    $region14: #{tpu_custom_call.1} parent=1 // pred_check
      _
    $region15: #{tpu_custom_call.1} parent=1 // pred_check_branch
      %1114 = sbr.rel (0) target = $region17
    $region16: #{tpu_custom_call.1} parent=1 // pred_region
      %1115 = dma.done [#allocation3], 16
    $region17: #{tpu_custom_call.1} parent=1 // pred_fallthru
      _
    %1116 = vsyncpa [#allocation3], 1

</llo_original>
